<compile_context>
chip_gen: v5e
topology: v5e:2x2
jax: 0.10.0
libtpu: 0.0.40
codegen_flags: <defaults>
</compile_context>

<pallas_src>
import functools

import jax
import jax.numpy as jnp
from jax.experimental import pallas as pl
from jax.experimental.pallas import tpu as pltpu


def _mlp_kernel(x_ref, w1_ref, b1_ref, w2_ref, b2_ref, w3_ref, b3_ref, o_ref):
    # In-kernel cast: x arrives as f32 over the DMA, cast to bf16 on the VPU
    # (free under the memory-bound DMA), accumulate in f32 on the MXU.
    x = x_ref[...].astype(w1_ref.dtype)
    # layer1: Linear(input_dim, hidden1) + ReLU
    h = jnp.dot(x, w1_ref[...], preferred_element_type=jnp.float32)
    h = jnp.maximum(h + b1_ref[...], 0.0)
    # layer2: Linear(hidden1, hidden2) + ReLU
    h = jnp.dot(h.astype(w2_ref.dtype), w2_ref[...],
                preferred_element_type=jnp.float32)
    h = jnp.maximum(h + b2_ref[...], 0.0)
    # layer3: Linear(hidden2, input_dim) + Tanh
    h = jnp.dot(h.astype(w3_ref.dtype), w3_ref[...],
                preferred_element_type=jnp.float32)
    o_ref[...] = jnp.tanh(h + b3_ref[...]).astype(o_ref.dtype)


def prepare_params(params, compute_dtype=jnp.bfloat16):
    """One-time conversion from PyTorch convention (out, in) weights to the
    kernel layout: (in, out) weights in the MXU compute dtype, (1, out) f32
    biases. Call once at parameter-load time, NOT per forward call."""
    return {
        "w1": jnp.asarray(params["layer1.weight"]).T.astype(compute_dtype),
        "b1": jnp.asarray(params["layer1.bias"], jnp.float32)[None, :],
        "w2": jnp.asarray(params["layer2.weight"]).T.astype(compute_dtype),
        "b2": jnp.asarray(params["layer2.bias"], jnp.float32)[None, :],
        "w3": jnp.asarray(params["layer3.weight"]).T.astype(compute_dtype),
        "b3": jnp.asarray(params["layer3.bias"], jnp.float32)[None, :],
    }


def _round_up(n, m):
    return ((n + m - 1) // m) * m


@functools.partial(jax.jit, static_argnames=("block_b",))
def fully_connected_forward(x, kp, block_b=1024):
    """x: (B, input_dim) float32. kp: output of prepare_params()."""
    B, input_dim = x.shape
    w1, b1 = kp["w1"], kp["b1"]
    w2, b2 = kp["w2"], kp["b2"]
    w3, b3 = kp["w3"], kp["b3"]
    hidden1 = w1.shape[1]
    hidden2 = w2.shape[1]
    out_dim = w3.shape[1]

    # Batch tile: large enough to amortize ~0.35us/grid-step overhead, but
    # clamped so the grid keeps >= 2 parallel steps (v7x has 2 TensorCores and
    # the parallel batch axis is what shards tiles across them). Multiple of 8
    # whenever it tiles B; otherwise equal to the full batch dim.
    half = _round_up(pl.cdiv(B, 2), 8)
    bb = min(block_b, half, B)
    grid = (pl.cdiv(B, bb),)

    flops = 2 * B * (input_dim * hidden1 + hidden1 * hidden2 + hidden2 * out_dim)
    bytes_accessed = (
        x.size * x.dtype.itemsize                                   # f32 x read
        + B * out_dim * jnp.dtype(jnp.float32).itemsize             # f32 out write
        + sum(a.size * a.dtype.itemsize for a in (w1, b1, w2, b2, w3, b3))
    )
    cost = pl.CostEstimate(flops=flops, transcendentals=B * out_dim,
                           bytes_accessed=bytes_accessed)

    return pl.pallas_call(
        _mlp_kernel,
        out_shape=jax.ShapeDtypeStruct((B, out_dim), jnp.float32),
        grid_spec=pl.GridSpec(
            grid=grid,
            in_specs=[
                pl.BlockSpec((bb, input_dim), lambda i: (i, 0)),       # x tile (f32)
                pl.BlockSpec((input_dim, hidden1), lambda i: (0, 0)),  # W1 (resident)
                pl.BlockSpec((1, hidden1), lambda i: (0, 0)),          # b1
                pl.BlockSpec((hidden1, hidden2), lambda i: (0, 0)),    # W2
                pl.BlockSpec((1, hidden2), lambda i: (0, 0)),          # b2
                pl.BlockSpec((hidden2, out_dim), lambda i: (0, 0)),    # W3
                pl.BlockSpec((1, out_dim), lambda i: (0, 0)),          # b3
            ],
            out_specs=pl.BlockSpec((bb, out_dim), lambda i: (i, 0)),
        ),
        compiler_params=pltpu.CompilerParams(
            dimension_semantics=("parallel",),   # batch tiles shard across TCs (v7x)
            vmem_limit_bytes=32 * 1024 * 1024,   # headroom for big tiles on v5e
        ),
        cost_estimate=cost,
    )(x, w1, b1, w2, b2, w3, b3)


def init_params(key, input_dim=256, hidden_dim1=256, hidden_dim2=128,
                dtype=jnp.float32):
    """Deterministic init matching nn.Linear default (uniform +-1/sqrt(fan_in)),
    stored in PyTorch convention: weight (out, in), bias (out,)."""
    keys = jax.random.split(key, 6)

    def uniform(k, shape, fan_in):
        bound = 1.0 / jnp.sqrt(jnp.asarray(fan_in, dtype))
        return jax.random.uniform(k, shape, dtype, -bound, bound)

    return {
        "layer1.weight": uniform(keys[0], (hidden_dim1, input_dim), input_dim),
        "layer1.bias":   uniform(keys[1], (hidden_dim1,), input_dim),
        "layer2.weight": uniform(keys[2], (hidden_dim2, hidden_dim1), hidden_dim1),
        "layer2.bias":   uniform(keys[3], (hidden_dim2,), hidden_dim1),
        "layer3.weight": uniform(keys[4], (input_dim, hidden_dim2), hidden_dim2),
        "layer3.bias":   uniform(keys[5], (input_dim,), hidden_dim2),
    }


def reference_forward(x, params):
    """Plain-JAX f32 reference reproducing the PyTorch forward semantics."""
    h = x @ params["layer1.weight"].T + params["layer1.bias"]
    h = jnp.maximum(h, 0.0)
    h = h @ params["layer2.weight"].T + params["layer2.bias"]
    h = jnp.maximum(h, 0.0)
    h = h @ params["layer3.weight"].T + params["layer3.bias"]
    return jnp.tanh(h)


if __name__ == "__main__":
    key = jax.random.PRNGKey(0)
    k_x, k_p = jax.random.split(key)

    input_dim, hidden_dim1, hidden_dim2 = 256, 256, 128
    B = 256          # small test batch; tile clamp -> 2 grid steps (2 TCs / pipeline)

    x = jax.random.normal(k_x, (B, input_dim), dtype=jnp.float32)
    torch_params = init_params(k_p, input_dim, hidden_dim1, hidden_dim2)

    # One-time layout conversion (transposes hoisted out of the hot path).
    kparams = prepare_params(torch_params, compute_dtype=jnp.bfloat16)

    out = fully_connected_forward(x, kparams, block_b=1024)
    out = jax.block_until_ready(out)

    ref = reference_forward(x, torch_params)
    assert out.shape == (B, input_dim), out.shape
    assert out.dtype == jnp.float32, out.dtype
    # bf16 MXU inputs with f32 accumulation: relax tolerance vs. the f32 reference.
    max_err = float(jnp.max(jnp.abs(out - ref)))
    assert max_err < 3e-2, max_err

    print("KERNEL_OK")
</pallas_src>

<mosaic_0001>
module attributes {stable_mosaic.version = 11 : i64} {
  func.func @_mlp_kernel(%arg0: i32, %arg1: memref<128x256xf32, #tpu.memory_space<vmem>>, %arg2: memref<256x256xbf16, #tpu.memory_space<vmem>>, %arg3: memref<1x256xf32, #tpu.memory_space<vmem>>, %arg4: memref<256x128xbf16, #tpu.memory_space<vmem>>, %arg5: memref<1x128xf32, #tpu.memory_space<vmem>>, %arg6: memref<128x256xbf16, #tpu.memory_space<vmem>>, %arg7: memref<1x256xf32, #tpu.memory_space<vmem>>, %arg8: memref<128x256xf32, #tpu.memory_space<vmem>>) attributes {dimension_semantics = [#tpu.dimension_semantics<parallel>], iteration_bounds = array<i64: 2>, scalar_prefetch = 0 : i64, scratch_operands = 0 : i64, tpu.core_type = #tpu.core_type<tc>, window_params = [{transform_indices = @transform_0, window_bounds = array<i64: 128, 256>}, {pipeline_mode = #tpu.pipeline_mode<synchronous>, transform_indices = @transform_1, window_bounds = array<i64: 256, 256>}, {pipeline_mode = #tpu.pipeline_mode<synchronous>, transform_indices = @transform_2, window_bounds = array<i64: 1, 256>}, {pipeline_mode = #tpu.pipeline_mode<synchronous>, transform_indices = @transform_3, window_bounds = array<i64: 256, 128>}, {pipeline_mode = #tpu.pipeline_mode<synchronous>, transform_indices = @transform_4, window_bounds = array<i64: 1, 128>}, {pipeline_mode = #tpu.pipeline_mode<synchronous>, transform_indices = @transform_5, window_bounds = array<i64: 128, 256>}, {pipeline_mode = #tpu.pipeline_mode<synchronous>, transform_indices = @transform_6, window_bounds = array<i64: 1, 256>}, {transform_indices = @transform_7, window_bounds = array<i64: 128, 256>}]} {
    %c0 = arith.constant 0 : index
    %c0_0 = arith.constant 0 : index
    %0 = vector.load %arg1[%c0, %c0_0] : memref<128x256xf32, #tpu.memory_space<vmem>>, vector<128x256xf32>
    %1 = arith.truncf %0 : vector<128x256xf32> to vector<128x256xbf16>
    %c0_1 = arith.constant 0 : index
    %c0_2 = arith.constant 0 : index
    %2 = vector.load %arg2[%c0_1, %c0_2] : memref<256x256xbf16, #tpu.memory_space<vmem>>, vector<256x256xbf16>
    %cst = arith.constant dense<0.000000e+00> : vector<128x256xf32>
    %3 = tpu.matmul %1, %2, %cst {dimension_numbers = #tpu.dot_dimension_numbers<[1], [0], [0], [1], [0, 0, 1, 1], [], []>} : vector<128x256xbf16>, vector<256x256xbf16>, vector<128x256xf32> -> vector<128x256xf32>
    %c0_3 = arith.constant 0 : index
    %c0_4 = arith.constant 0 : index
    %4 = vector.load %arg3[%c0_3, %c0_4] : memref<1x256xf32, #tpu.memory_space<vmem>>, vector<1x256xf32>
    %5 = vector.broadcast %4 : vector<1x256xf32> to vector<128x256xf32>
    %6 = arith.addf %3, %5 : vector<128x256xf32>
    %cst_5 = arith.constant 0.000000e+00 : f32
    %7 = vector.broadcast %cst_5 : f32 to vector<128x256xf32>
    %8 = arith.maximumf %6, %7 : vector<128x256xf32>
    %9 = arith.truncf %8 : vector<128x256xf32> to vector<128x256xbf16>
    %c0_6 = arith.constant 0 : index
    %c0_7 = arith.constant 0 : index
    %10 = vector.load %arg4[%c0_6, %c0_7] : memref<256x128xbf16, #tpu.memory_space<vmem>>, vector<256x128xbf16>
    %cst_8 = arith.constant dense<0.000000e+00> : vector<128x128xf32>
    %11 = tpu.matmul %9, %10, %cst_8 {dimension_numbers = #tpu.dot_dimension_numbers<[1], [0], [0], [1], [0, 0, 1, 1], [], []>} : vector<128x256xbf16>, vector<256x128xbf16>, vector<128x128xf32> -> vector<128x128xf32>
    %c0_9 = arith.constant 0 : index
    %c0_10 = arith.constant 0 : index
    %12 = vector.load %arg5[%c0_9, %c0_10] : memref<1x128xf32, #tpu.memory_space<vmem>>, vector<1x128xf32>
    %13 = vector.broadcast %12 : vector<1x128xf32> to vector<128x128xf32>
    %14 = arith.addf %11, %13 : vector<128x128xf32>
    %cst_11 = arith.constant 0.000000e+00 : f32
    %15 = vector.broadcast %cst_11 : f32 to vector<128x128xf32>
    %16 = arith.maximumf %14, %15 : vector<128x128xf32>
    %17 = arith.truncf %16 : vector<128x128xf32> to vector<128x128xbf16>
    %c0_12 = arith.constant 0 : index
    %c0_13 = arith.constant 0 : index
    %18 = vector.load %arg6[%c0_12, %c0_13] : memref<128x256xbf16, #tpu.memory_space<vmem>>, vector<128x256xbf16>
    %cst_14 = arith.constant dense<0.000000e+00> : vector<128x256xf32>
    %19 = tpu.matmul %17, %18, %cst_14 {dimension_numbers = #tpu.dot_dimension_numbers<[1], [0], [0], [1], [0, 0, 1, 1], [], []>} : vector<128x128xbf16>, vector<128x256xbf16>, vector<128x256xf32> -> vector<128x256xf32>
    %c0_15 = arith.constant 0 : index
    %c0_16 = arith.constant 0 : index
    %20 = vector.load %arg7[%c0_15, %c0_16] : memref<1x256xf32, #tpu.memory_space<vmem>>, vector<1x256xf32>
    %21 = vector.broadcast %20 : vector<1x256xf32> to vector<128x256xf32>
    %22 = arith.addf %19, %21 : vector<128x256xf32>
    %23 = math.tanh %22 : vector<128x256xf32>
    %c0_17 = arith.constant 0 : index
    %c0_18 = arith.constant 0 : index
    %24 = vector.load %arg8[%c0_17, %c0_18] : memref<128x256xf32, #tpu.memory_space<vmem>>, vector<128x256xf32>
    tpu.vector_store %arg8[%c0_17, %c0_18], %23 {strides = array<i32>} : memref<128x256xf32, #tpu.memory_space<vmem>>, vector<128x256xf32>,
    return
  }
  func.func @transform_0(%arg0: i32) -> (i32, i32) {
    %c0_i32 = arith.constant 0 : i32
    %c0_i32_0 = arith.constant 0 : i32
    return %arg0, %c0_i32 : i32, i32
  }
  func.func @transform_1(%arg0: i32) -> (i32, i32) {
    %c0_i32 = arith.constant 0 : i32
    %c0_i32_0 = arith.constant 0 : i32
    %c0_i32_1 = arith.constant 0 : i32
    return %c0_i32, %c0_i32_0 : i32, i32
  }
  func.func @transform_2(%arg0: i32) -> (i32, i32) {
    %c0_i32 = arith.constant 0 : i32
    %c0_i32_0 = arith.constant 0 : i32
    %c0_i32_1 = arith.constant 0 : i32
    return %c0_i32, %c0_i32_0 : i32, i32
  }
  func.func @transform_3(%arg0: i32) -> (i32, i32) {
    %c0_i32 = arith.constant 0 : i32
    %c0_i32_0 = arith.constant 0 : i32
    %c0_i32_1 = arith.constant 0 : i32
    return %c0_i32, %c0_i32_0 : i32, i32
  }
  func.func @transform_4(%arg0: i32) -> (i32, i32) {
    %c0_i32 = arith.constant 0 : i32
    %c0_i32_0 = arith.constant 0 : i32
    %c0_i32_1 = arith.constant 0 : i32
    return %c0_i32, %c0_i32_0 : i32, i32
  }
  func.func @transform_5(%arg0: i32) -> (i32, i32) {
    %c0_i32 = arith.constant 0 : i32
    %c0_i32_0 = arith.constant 0 : i32
    %c0_i32_1 = arith.constant 0 : i32
    return %c0_i32, %c0_i32_0 : i32, i32
  }
  func.func @transform_6(%arg0: i32) -> (i32, i32) {
    %c0_i32 = arith.constant 0 : i32
    %c0_i32_0 = arith.constant 0 : i32
    %c0_i32_1 = arith.constant 0 : i32
    return %c0_i32, %c0_i32_0 : i32, i32
  }
  func.func @transform_7(%arg0: i32) -> (i32, i32) {
    %c0_i32 = arith.constant 0 : i32
    %c0_i32_0 = arith.constant 0 : i32
    return %arg0, %c0_i32 : i32, i32
  }
}

</mosaic_0001>

<llo_original>
// kernel: fully_connected_forward.1
$region0: #{fully_connected_forward.1}
  #allocation0 [shape = 'u32[]', space=smem, size = 0x4, offset = 0x4, fixed_abs, tag = 'smem constant byte address 0x4 - core index']
  #allocation1 [shape = 'u32[72,128]{1,0:T(1,128)}', space=vmem, size = 0x9000, scoped, tag = 'internal scratch']
  %s0 = inlined_call_operand.hbm [shape: f32[256,256], index: 0, kind: input, shape index: {}]
  %s1 = inlined_call_operand.hbm [shape: bf16[256,256], index: 1, kind: input, shape index: {}]
  %s2 = inlined_call_operand.hbm [shape: f32[1,256], index: 2, kind: input, shape index: {}]
  %s3 = inlined_call_operand.hbm [shape: bf16[256,128], index: 3, kind: input, shape index: {}]
  %s4 = inlined_call_operand.hbm [shape: f32[1,128], index: 4, kind: input, shape index: {}]
  %s5 = inlined_call_operand.hbm [shape: bf16[128,256], index: 5, kind: input, shape index: {}]
  %s6 = inlined_call_operand.vmem [shape: f32[1,256], index: 6, kind: input, shape index: {}]
  %s7 = inlined_call_operand.hbm [shape: f32[256,256], index: 7, kind: output, shape index: {}]
  %s8 = sld [smem:[#allocation0]]
  $region85: #{fully_connected_forward.1} parent=0
    _
  %s10 = ssub.s32 1, %s8
  %s11 = scalar_select 0, %s10, %s8
  $region1: #{fully_connected_forward.1} parent=0
    #allocation2 [shape = 'u8[262144]{0}', space=vmem, size = 0x40000, scoped, tag = 'input window, operand 0']
    #allocation3 [shape = 's32[2]{0}', space=sflag, size = 0x8, scoped, tag = 'scoped memory for fully_connected_forward.1']
    #allocation4 [shape = 's32[2]{0}', space=sflag, size = 0x8, scoped, tag = 'scoped memory for fully_connected_forward.1']
    #allocation5 [shape = 'u8[131072]{0}', space=vmem, size = 0x20000, scoped, tag = 'input window, operand 1, single buffered']
    #allocation6 [shape = 's32[1]{0}', space=sflag, size = 0x4, scoped, tag = 'scoped memory for fully_connected_forward.1']
    #allocation7 [shape = 'u8[1024]{0}', space=vmem, size = 0x400, scoped, tag = 'input window, operand 2, single buffered']
    #allocation8 [shape = 'u8[65536]{0}', space=vmem, size = 0x10000, scoped, tag = 'input window, operand 3, single buffered']
    #allocation9 [shape = 's32[1]{0}', space=sflag, size = 0x4, scoped, tag = 'scoped memory for fully_connected_forward.1']
    #allocation10 [shape = 'u8[512]{0}', space=vmem, size = 0x400, scoped, tag = 'input window, operand 4, single buffered']
    #allocation11 [shape = 'u8[65536]{0}', space=vmem, size = 0x10000, scoped, tag = 'input window, operand 5, single buffered']
    #allocation12 [shape = 's32[1]{0}', space=sflag, size = 0x4, scoped, tag = 'scoped memory for fully_connected_forward.1']
    #allocation13 [shape = 'u8[262144]{0}', space=vmem, size = 0x40000, scoped, tag = 'output window, operand 0']
    %12 = vsyncpa [#allocation3], 0
    %s13 = scalar_lea.sflag [#allocation3], 1
    %14 = vsyncpa %s13, 0
    %15 = vsyncpa [#allocation6], 0
    %16 = vsyncpa [#allocation9], 0
    %17 = vsyncpa [#allocation12], 0
    %18 = vsyncpa [#allocation4], 0
    %s19 = scalar_lea.sflag [#allocation4], 1
    %20 = vsyncpa %s19, 0
    loop: start=0, step=1, limit=4
    $region2: #{fully_connected_forward.1} parent=1 // loop_pre_header
      _
    $region3: #{fully_connected_forward.1} parent=1 // loop_header
      %s22 = sphi 0, %s26
      %p23 = scmp.ge.s32.totalorder %s22, 4
      %s32 = sphi 0, %s34
      %s35 = sphi 0, %s32
      %s36 = sphi 0, %s35
      %s52 = sphi 0, %s36
      %s56 = sphi 0, %s56
      %s58 = sphi 0, %s56
      %s59 = sphi 0, %s58
      %s73 = sphi 0, %s59
      %s77 = sphi 0, %s77
      %s79 = sphi 0, %s77
      %s80 = sphi 0, %s79
      %s94 = sphi 0, %s80
      %s98 = sphi 0, %s98
      %s100 = sphi 0, %s98
      %s101 = sphi 0, %s100
      %s115 = sphi 0, %s101
      %s119 = sphi 0, %s119
      %s121 = sphi 0, %s119
      %s122 = sphi 0, %s121
      %s136 = sphi 0, %s122
      %s140 = sphi 0, %s140
      %s142 = sphi 0, %s140
      %s143 = sphi 0, %s142
      %s157 = sphi 0, %s143
      %s161 = sphi 0, %s161
      %s163 = sphi 0, %s161
      %s164 = sphi 0, %s163
      %s178 = sphi 0, %s164
      %s184 = sphi 0, %s186
      %s187 = sphi 0, %s184
      %s188 = sphi 0, %s187
      %s204 = sphi 0, %s188
    $region4: #{fully_connected_forward.1} parent=1 // loop_header_branch
      %25 = sbr.rel (%p23) target = $region8
    $region5: #{fully_connected_forward.1} parent=1 // loop_body
      %s27 = ssub.s32 %s22, 1
      %s28 = ssub.s32 %s22, 2
      %s29 = sadd.s32 %s22, 1
      %s30 = ssub.s32 %s22, %s29
      %p31 = scmp.eq.s32.totalorder %s30, 0
      %s33 = sadd.s32 %s32, 1
      %s34 = scalar_select %p31, %s32, %s33
      %p37 = pneg %p31
      %p38 = scmp.eq.s32.totalorder %s22, 1
      %p39 = por %p37, %p38
      %p40 = scmp.ne.s32.totalorder %s32, %s35
      %p41 = scmp.eq.s32.totalorder %s22, 0
      %p42 = por %p40, %p41
      %p43 = scmp.ne.s32.totalorder %s32, %s35
      %p44 = scmp.eq.s32.totalorder %s27, 1
      %p45 = por %p43, %p44
      %p46 = scmp.ne.s32.totalorder %s35, %s36
      %p47 = scmp.eq.s32.totalorder %s27, 0
      %p48 = por %p46, %p47
      %p49 = scmp.ne.s32.totalorder %s35, %s36
      %p50 = scmp.eq.s32.totalorder %s28, 1
      %p51 = por %p49, %p50
      %p53 = scmp.ne.s32.totalorder %s36, %s52
      %p54 = scmp.eq.s32.totalorder %s28, 0
      %p55 = por %p53, %p54
      %s57 = sadd.s32 %s56, 1
      %p60 = scmp.eq.s32.totalorder %s22, 1
      %p61 = scmp.ne.s32.totalorder %s56, %s58
      %p62 = scmp.eq.s32.totalorder %s22, 0
      %p63 = por %p61, %p62
      %p64 = scmp.ne.s32.totalorder %s56, %s58
      %p65 = scmp.eq.s32.totalorder %s27, 1
      %p66 = por %p64, %p65
      %p67 = scmp.ne.s32.totalorder %s58, %s59
      %p68 = scmp.eq.s32.totalorder %s27, 0
      %p69 = por %p67, %p68
      %p70 = scmp.ne.s32.totalorder %s58, %s59
      %p71 = scmp.eq.s32.totalorder %s28, 1
      %p72 = por %p70, %p71
      %p74 = scmp.ne.s32.totalorder %s59, %s73
      %p75 = scmp.eq.s32.totalorder %s28, 0
      %p76 = por %p74, %p75
      %s78 = sadd.s32 %s77, 1
      %p81 = scmp.eq.s32.totalorder %s22, 1
      %p82 = scmp.ne.s32.totalorder %s77, %s79
      %p83 = scmp.eq.s32.totalorder %s22, 0
      %p84 = por %p82, %p83
      %p85 = scmp.ne.s32.totalorder %s77, %s79
      %p86 = scmp.eq.s32.totalorder %s27, 1
      %p87 = por %p85, %p86
      %p88 = scmp.ne.s32.totalorder %s79, %s80
      %p89 = scmp.eq.s32.totalorder %s27, 0
      %p90 = por %p88, %p89
      %p91 = scmp.ne.s32.totalorder %s79, %s80
      %p92 = scmp.eq.s32.totalorder %s28, 1
      %p93 = por %p91, %p92
      %p95 = scmp.ne.s32.totalorder %s80, %s94
      %p96 = scmp.eq.s32.totalorder %s28, 0
      %p97 = por %p95, %p96
      %s99 = sadd.s32 %s98, 1
      %p102 = scmp.eq.s32.totalorder %s22, 1
      %p103 = scmp.ne.s32.totalorder %s98, %s100
      %p104 = scmp.eq.s32.totalorder %s22, 0
      %p105 = por %p103, %p104
      %p106 = scmp.ne.s32.totalorder %s98, %s100
      %p107 = scmp.eq.s32.totalorder %s27, 1
      %p108 = por %p106, %p107
      %p109 = scmp.ne.s32.totalorder %s100, %s101
      %p110 = scmp.eq.s32.totalorder %s27, 0
      %p111 = por %p109, %p110
      %p112 = scmp.ne.s32.totalorder %s100, %s101
      %p113 = scmp.eq.s32.totalorder %s28, 1
      %p114 = por %p112, %p113
      %p116 = scmp.ne.s32.totalorder %s101, %s115
      %p117 = scmp.eq.s32.totalorder %s28, 0
      %p118 = por %p116, %p117
      %s120 = sadd.s32 %s119, 1
      %p123 = scmp.eq.s32.totalorder %s22, 1
      %p124 = scmp.ne.s32.totalorder %s119, %s121
      %p125 = scmp.eq.s32.totalorder %s22, 0
      %p126 = por %p124, %p125
      %p127 = scmp.ne.s32.totalorder %s119, %s121
      %p128 = scmp.eq.s32.totalorder %s27, 1
      %p129 = por %p127, %p128
      %p130 = scmp.ne.s32.totalorder %s121, %s122
      %p131 = scmp.eq.s32.totalorder %s27, 0
      %p132 = por %p130, %p131
      %p133 = scmp.ne.s32.totalorder %s121, %s122
      %p134 = scmp.eq.s32.totalorder %s28, 1
      %p135 = por %p133, %p134
      %p137 = scmp.ne.s32.totalorder %s122, %s136
      %p138 = scmp.eq.s32.totalorder %s28, 0
      %p139 = por %p137, %p138
      %s141 = sadd.s32 %s140, 1
      %p144 = scmp.eq.s32.totalorder %s22, 1
      %p145 = scmp.ne.s32.totalorder %s140, %s142
      %p146 = scmp.eq.s32.totalorder %s22, 0
      %p147 = por %p145, %p146
      %p148 = scmp.ne.s32.totalorder %s140, %s142
      %p149 = scmp.eq.s32.totalorder %s27, 1
      %p150 = por %p148, %p149
      %p151 = scmp.ne.s32.totalorder %s142, %s143
      %p152 = scmp.eq.s32.totalorder %s27, 0
      %p153 = por %p151, %p152
      %p154 = scmp.ne.s32.totalorder %s142, %s143
      %p155 = scmp.eq.s32.totalorder %s28, 1
      %p156 = por %p154, %p155
      %p158 = scmp.ne.s32.totalorder %s143, %s157
      %p159 = scmp.eq.s32.totalorder %s28, 0
      %p160 = por %p158, %p159
      %s162 = sadd.s32 %s161, 1
      %p165 = scmp.eq.s32.totalorder %s22, 1
      %p166 = scmp.ne.s32.totalorder %s161, %s163
      %p167 = scmp.eq.s32.totalorder %s22, 0
      %p168 = por %p166, %p167
      %p169 = scmp.ne.s32.totalorder %s161, %s163
      %p170 = scmp.eq.s32.totalorder %s27, 1
      %p171 = por %p169, %p170
      %p172 = scmp.ne.s32.totalorder %s163, %s164
      %p173 = scmp.eq.s32.totalorder %s27, 0
      %p174 = por %p172, %p173
      %p175 = scmp.ne.s32.totalorder %s163, %s164
      %p176 = scmp.eq.s32.totalorder %s28, 1
      %p177 = por %p175, %p176
      %p179 = scmp.ne.s32.totalorder %s164, %s178
      %p180 = scmp.eq.s32.totalorder %s28, 0
      %p181 = por %p179, %p180
      %s182 = ssub.s32 %s22, %s29
      %p183 = scmp.eq.s32.totalorder %s182, 0
      %s185 = sadd.s32 %s184, 1
      %s186 = scalar_select %p183, %s184, %s185
      %p189 = pneg %p183
      %p190 = scmp.eq.s32.totalorder %s22, 1
      %p191 = por %p189, %p190
      %p192 = scmp.ne.s32.totalorder %s184, %s187
      %p193 = scmp.eq.s32.totalorder %s22, 0
      %p194 = por %p192, %p193
      %p195 = scmp.ne.s32.totalorder %s184, %s187
      %p196 = scmp.eq.s32.totalorder %s27, 1
      %p197 = por %p195, %p196
      %p198 = scmp.ne.s32.totalorder %s187, %s188
      %p199 = scmp.eq.s32.totalorder %s27, 0
      %p200 = por %p198, %p199
      %p201 = scmp.ne.s32.totalorder %s187, %s188
      %p202 = scmp.eq.s32.totalorder %s28, 1
      %p203 = por %p201, %p202
      %p205 = scmp.ne.s32.totalorder %s188, %s204
      %p206 = scmp.eq.s32.totalorder %s28, 0
      %p207 = por %p205, %p206
      %p208 = scmp.le.s32.totalorder 1, %s22
      %p209 = scmp.lt.s32.totalorder %s22, 3
      %p210 = pnand %p208, %p209
      %p211 = pneg %p210
      // Predicated region
      $region9: #{fully_connected_forward.1} parent=5 // pred_check
        _
      $region10: #{fully_connected_forward.1} parent=5 // pred_check_branch
        %213 = sbr.rel (%p210) target = $region12
      $region11: #{fully_connected_forward.1} parent=5 // pred_region
        %s214 = ssub.s32 %s22, 1
        // Predicated region
        $region13: #{fully_connected_forward.1} parent=11 // pred_check
          %p215 = pneg %p69
        $region14: #{fully_connected_forward.1} parent=11 // pred_check_branch
          %217 = sbr.rel (%p215) target = $region16
        $region15: #{fully_connected_forward.1} parent=11 // pred_region
          %219 = vsyncadd [#allocation6], 0
          %s220 = sshll.u32 %s1, 4
          %s221 = int_to_ptr.hbm [resolvable:$true] %s220
          %s222 = sshll.u32 [#allocation5], 4
          %s223 = int_to_ptr.vmem [resolvable:$true] %s222
          %228 = dma.hbm_to_vmem [thread:$0]  %s221, 4096, %s223, [#allocation6], 128, 128, 8
        $region16: #{fully_connected_forward.1} parent=11 // pred_fallthru
          _
        // Predicated region
        $region17: #{fully_connected_forward.1} parent=11 // pred_check
          %p229 = pneg %p90
        $region18: #{fully_connected_forward.1} parent=11 // pred_check_branch
          %231 = sbr.rel (%p229) target = $region20
        $region19: #{fully_connected_forward.1} parent=11 // pred_region
          %233 = vsyncadd [#allocation6], 0
          %s235 = sshll.u32 %s2, 4
          %s236 = int_to_ptr.hbm [resolvable:$true] %s235
          %s237 = sshll.u32 [#allocation7], 4
          %s238 = int_to_ptr.vmem [resolvable:$true] %s237
          %240 = dma.hbm_to_vmem [thread:$0]  %s236, 32, %s238, [#allocation6]
        $region20: #{fully_connected_forward.1} parent=11 // pred_fallthru
          _
        // Predicated region
        $region21: #{fully_connected_forward.1} parent=11 // pred_check
          %p241 = pneg %p111
        $region22: #{fully_connected_forward.1} parent=11 // pred_check_branch
          %243 = sbr.rel (%p241) target = $region24
        $region23: #{fully_connected_forward.1} parent=11 // pred_region
          %245 = vsyncadd [#allocation9], 0
          %s246 = sshll.u32 %s3, 4
          %s247 = int_to_ptr.hbm [resolvable:$true] %s246
          %s248 = sshll.u32 [#allocation8], 4
          %s249 = int_to_ptr.vmem [resolvable:$true] %s248
          %254 = dma.hbm_to_vmem [thread:$0]  %s247, 2048, %s249, [#allocation9], 64, 64, 4
        $region24: #{fully_connected_forward.1} parent=11 // pred_fallthru
          _
        // Predicated region
        $region25: #{fully_connected_forward.1} parent=11 // pred_check
          %p255 = pneg %p132
        $region26: #{fully_connected_forward.1} parent=11 // pred_check_branch
          %257 = sbr.rel (%p255) target = $region28
        $region27: #{fully_connected_forward.1} parent=11 // pred_region
          %259 = vsyncadd [#allocation9], 0
          %s261 = sshll.u32 %s4, 4
          %s262 = int_to_ptr.hbm [resolvable:$true] %s261
          %s263 = sshll.u32 [#allocation10], 4
          %s264 = int_to_ptr.vmem [resolvable:$true] %s263
          %266 = dma.hbm_to_vmem [thread:$0]  %s262, 16, %s264, [#allocation9]
        $region28: #{fully_connected_forward.1} parent=11 // pred_fallthru
          _
        // Predicated region
        $region29: #{fully_connected_forward.1} parent=11 // pred_check
          %p267 = pneg %p153
        $region30: #{fully_connected_forward.1} parent=11 // pred_check_branch
          %269 = sbr.rel (%p267) target = $region32
        $region31: #{fully_connected_forward.1} parent=11 // pred_region
          %271 = vsyncadd [#allocation12], 0
          %s272 = sshll.u32 %s5, 4
          %s273 = int_to_ptr.hbm [resolvable:$true] %s272
          %s274 = sshll.u32 [#allocation11], 4
          %s275 = int_to_ptr.vmem [resolvable:$true] %s274
          %280 = dma.hbm_to_vmem [thread:$0]  %s273, 2048, %s275, [#allocation12], 128, 128, 8
        $region32: #{fully_connected_forward.1} parent=11 // pred_fallthru
          _
        // Predicated region
        $region33: #{fully_connected_forward.1} parent=11 // pred_check
          %p281 = pneg %p174
        $region34: #{fully_connected_forward.1} parent=11 // pred_check_branch
          %283 = sbr.rel (%p281) target = $region36
        $region35: #{fully_connected_forward.1} parent=11 // pred_region
          _
        $region36: #{fully_connected_forward.1} parent=11 // pred_fallthru
          _
      $region12: #{fully_connected_forward.1} parent=5 // pred_fallthru
        _
      %p284 = scmp.lt.s32.totalorder %s22, 2
      // Predicated region
      $region37: #{fully_connected_forward.1} parent=5 // pred_check
        %p285 = pneg %p284
      $region38: #{fully_connected_forward.1} parent=5 // pred_check_branch
        %287 = sbr.rel (%p285) target = $region40
      $region39: #{fully_connected_forward.1} parent=5 // pred_region
        // Predicated region
        $region41: #{fully_connected_forward.1} parent=39 // pred_check
          %p288 = pneg %p42
        $region42: #{fully_connected_forward.1} parent=39 // pred_check_branch
          %290 = sbr.rel (%p288) target = $region44
        $region43: #{fully_connected_forward.1} parent=39 // pred_region
          %s291 = sand.u32 %s32, 1
          %s292 = scalar_lea.sflag [#allocation3], %s291
          %s293 = sand.u32 %s32, 1
          %s294 = smul.addr %s293, 256
          %s295 = scalar_lea.vmem [#allocation2], %s294
          %s296 = smul.u32 16, %s22
          %298 = vsyncadd %s292, 0
          %s299 = smul.addr %s296, 2
          %s300 = smul.addr %s299, 8
          %s301 = scalar_lea.hbm %s0, %s300
          %s302 = sshll.u32 %s301, 4
          %s303 = int_to_ptr.hbm [resolvable:$true] %s302
          %s304 = sshll.u32 %s295, 4
          %s305 = int_to_ptr.vmem [resolvable:$true] %s304
          %310 = dma.hbm_to_vmem [thread:$0]  %s303, 4096, %s305, %s292, 256, 256, 16
        $region44: #{fully_connected_forward.1} parent=39 // pred_fallthru
          _
      $region40: #{fully_connected_forward.1} parent=5 // pred_fallthru
        _
      %p311 = scmp.le.s32.totalorder 1, %s22
      %p312 = scmp.lt.s32.totalorder %s22, 3
      %p313 = pnand %p311, %p312
      %p314 = pneg %p313
      // Predicated region
      $region45: #{fully_connected_forward.1} parent=5 // pred_check
        _
      $region46: #{fully_connected_forward.1} parent=5 // pred_check_branch
        %316 = sbr.rel (%p313) target = $region48
      $region47: #{fully_connected_forward.1} parent=5 // pred_region
        %s317 = ssub.s32 %s22, 1
        %s318 = sand.u32 %s35, 1
        %s319 = scalar_lea.sflag [#allocation3], %s318
        %s320 = sand.u32 %s35, 1
        %s321 = smul.addr %s320, 256
        %s322 = scalar_lea.vmem [#allocation2], %s321
        // Predicated region
        $region49: #{fully_connected_forward.1} parent=47 // pred_check
          %p323 = pneg %p48
        $region50: #{fully_connected_forward.1} parent=47 // pred_check_branch
          %325 = sbr.rel (%p323) target = $region52
        $region51: #{fully_connected_forward.1} parent=47 // pred_region
          %327 = dma.done %s319, 4096
        $region52: #{fully_connected_forward.1} parent=47 // pred_fallthru
          _
        // Predicated region
        $region53: #{fully_connected_forward.1} parent=47 // pred_check
          %p328 = pneg %p69
        $region54: #{fully_connected_forward.1} parent=47 // pred_check_branch
          %330 = sbr.rel (%p328) target = $region56
        $region55: #{fully_connected_forward.1} parent=47 // pred_region
          %332 = dma.done [#allocation6], 4096
        $region56: #{fully_connected_forward.1} parent=47 // pred_fallthru
          _
        // Predicated region
        $region57: #{fully_connected_forward.1} parent=47 // pred_check
          %p333 = pneg %p90
        $region58: #{fully_connected_forward.1} parent=47 // pred_check_branch
          %335 = sbr.rel (%p333) target = $region60
        $region59: #{fully_connected_forward.1} parent=47 // pred_region
          %337 = dma.done [#allocation6], 32
        $region60: #{fully_connected_forward.1} parent=47 // pred_fallthru
          _
        // Predicated region
        $region61: #{fully_connected_forward.1} parent=47 // pred_check
          %p338 = pneg %p111
        $region62: #{fully_connected_forward.1} parent=47 // pred_check_branch
          %340 = sbr.rel (%p338) target = $region64
        $region63: #{fully_connected_forward.1} parent=47 // pred_region
          %342 = dma.done [#allocation9], 2048
        $region64: #{fully_connected_forward.1} parent=47 // pred_fallthru
          _
        // Predicated region
        $region65: #{fully_connected_forward.1} parent=47 // pred_check
          %p343 = pneg %p132
        $region66: #{fully_connected_forward.1} parent=47 // pred_check_branch
          %345 = sbr.rel (%p343) target = $region68
        $region67: #{fully_connected_forward.1} parent=47 // pred_region
          %347 = dma.done [#allocation9], 16
        $region68: #{fully_connected_forward.1} parent=47 // pred_fallthru
          _
        // Predicated region
        $region69: #{fully_connected_forward.1} parent=47 // pred_check
          %p348 = pneg %p153
        $region70: #{fully_connected_forward.1} parent=47 // pred_check_branch
          %350 = sbr.rel (%p348) target = $region72
        $region71: #{fully_connected_forward.1} parent=47 // pred_region
          %352 = dma.done [#allocation12], 2048
        $region72: #{fully_connected_forward.1} parent=47 // pred_fallthru
          _
        %s353 = sand.u32 %s35, 1
        %s354 = scalar_lea.sflag [#allocation3], %s353
        %s355 = sand.u32 %s35, 1
        %s356 = smul.addr %s355, 256
        %s357 = scalar_lea.vmem [#allocation2], %s356
        %p358 = pneg %p48
        %p359 = pneg %p45
        %p360 = pneg %p69
        %p361 = pneg %p66
        %p362 = pneg %p90
        %p363 = pneg %p87
        %p364 = pneg %p111
        %p365 = pneg %p108
        %p366 = pneg %p132
        %p367 = pneg %p129
        %p368 = pneg %p153
        %p369 = pneg %p150
        %p370 = pneg %p174
        %p371 = pneg %p171
        %p372 = pneg %p200
        %p373 = pneg %p197
        %s374 = sand.u32 %s187, 1
        %s375 = scalar_lea.sflag [#allocation4], %s374
        %s376 = sand.u32 %s187, 1
        %s377 = smul.addr %s376, 256
        %s378 = scalar_lea.vmem [#allocation13], %s377
        %s379 = smul.u32 16, %s27
        %s380 = smul.u32 16, %s27
        %v381 = vld [vmem:[%s322] sm:$0xff]
        %v382 = vld [vmem:[%s322 + $0x8] sm:$0xff]
        %v383 = vld [vmem:[%s322 + $0x10] sm:$0xff]
        %v384 = vld [vmem:[%s322 + $0x18] sm:$0xff]
        %v385 = vld [vmem:[%s322 + $0x20] sm:$0xff]
        %v386 = vld [vmem:[%s322 + $0x28] sm:$0xff]
        %v387 = vld [vmem:[%s322 + $0x30] sm:$0xff]
        %v388 = vld [vmem:[%s322 + $0x38] sm:$0xff]
        %v389 = vld [vmem:[%s322 + $0x40] sm:$0xff]
        %v390 = vld [vmem:[%s322 + $0x48] sm:$0xff]
        %v391 = vld [vmem:[%s322 + $0x50] sm:$0xff]
        %v392 = vld [vmem:[%s322 + $0x58] sm:$0xff]
        %v393 = vld [vmem:[%s322 + $0x60] sm:$0xff]
        %v394 = vld [vmem:[%s322 + $0x68] sm:$0xff]
        %v395 = vld [vmem:[%s322 + $0x70] sm:$0xff]
        %v396 = vld [vmem:[%s322 + $0x78] sm:$0xff]
        %v397 = vld [vmem:[%s322 + $0x80] sm:$0xff]
        %v398 = vld [vmem:[%s322 + $0x88] sm:$0xff]
        %v399 = vld [vmem:[%s322 + $0x90] sm:$0xff]
        %v400 = vld [vmem:[%s322 + $0x98] sm:$0xff]
        %v401 = vld [vmem:[%s322 + $0xa0] sm:$0xff]
        %v402 = vld [vmem:[%s322 + $0xa8] sm:$0xff]
        %v403 = vld [vmem:[%s322 + $0xb0] sm:$0xff]
        %v404 = vld [vmem:[%s322 + $0xb8] sm:$0xff]
        %v405 = vld [vmem:[%s322 + $0xc0] sm:$0xff]
        %v406 = vld [vmem:[%s322 + $0xc8] sm:$0xff]
        %v407 = vld [vmem:[%s322 + $0xd0] sm:$0xff]
        %v408 = vld [vmem:[%s322 + $0xd8] sm:$0xff]
        %v409 = vld [vmem:[%s322 + $0xe0] sm:$0xff]
        %v410 = vld [vmem:[%s322 + $0xe8] sm:$0xff]
        %v411 = vld [vmem:[%s322 + $0xf0] sm:$0xff]
        %v412 = vld [vmem:[%s322 + $0xf8] sm:$0xff]
        %v413 = vpack.c.bf16 %v383, %v381
        %v414 = vpack.c.bf16 %v384, %v382
        %v415 = vpack.c.bf16 %v387, %v385
        %v416 = vpack.c.bf16 %v388, %v386
        %v417 = vpack.c.bf16 %v391, %v389
        %v418 = vpack.c.bf16 %v392, %v390
        %v419 = vpack.c.bf16 %v395, %v393
        %v420 = vpack.c.bf16 %v396, %v394
        %v421 = vpack.c.bf16 %v399, %v397
        %v422 = vpack.c.bf16 %v400, %v398
        %v423 = vpack.c.bf16 %v403, %v401
        %v424 = vpack.c.bf16 %v404, %v402
        %v425 = vpack.c.bf16 %v407, %v405
        %v426 = vpack.c.bf16 %v408, %v406
        %v427 = vpack.c.bf16 %v411, %v409
        %v428 = vpack.c.bf16 %v412, %v410
        %v429 = vld [vmem:[#allocation5] sm:$0xff]
        %v430 = vld [vmem:[#allocation5 + $0x8] sm:$0xff]
        %v431 = vld [vmem:[#allocation5 + $0x10] sm:$0xff]
        %v432 = vld [vmem:[#allocation5 + $0x18] sm:$0xff]
        %v433 = vld [vmem:[#allocation5 + $0x20] sm:$0xff]
        %v434 = vld [vmem:[#allocation5 + $0x28] sm:$0xff]
        %v435 = vld [vmem:[#allocation5 + $0x30] sm:$0xff]
        %v436 = vld [vmem:[#allocation5 + $0x38] sm:$0xff]
        %v437 = vld [vmem:[#allocation5 + $0x40] sm:$0xff]
        %v438 = vld [vmem:[#allocation5 + $0x48] sm:$0xff]
        %v439 = vld [vmem:[#allocation5 + $0x50] sm:$0xff]
        %v440 = vld [vmem:[#allocation5 + $0x58] sm:$0xff]
        %v441 = vld [vmem:[#allocation5 + $0x60] sm:$0xff]
        %v442 = vld [vmem:[#allocation5 + $0x68] sm:$0xff]
        %v443 = vld [vmem:[#allocation5 + $0x70] sm:$0xff]
        %v444 = vld [vmem:[#allocation5 + $0x78] sm:$0xff]
        %v445 = vld [vmem:[#allocation5 + $0x80] sm:$0xff]
        %v446 = vld [vmem:[#allocation5 + $0x88] sm:$0xff]
        %v447 = vld [vmem:[#allocation5 + $0x90] sm:$0xff]
        %v448 = vld [vmem:[#allocation5 + $0x98] sm:$0xff]
        %v449 = vld [vmem:[#allocation5 + $0xa0] sm:$0xff]
        %v450 = vld [vmem:[#allocation5 + $0xa8] sm:$0xff]
        %v451 = vld [vmem:[#allocation5 + $0xb0] sm:$0xff]
        %v452 = vld [vmem:[#allocation5 + $0xb8] sm:$0xff]
        %v453 = vld [vmem:[#allocation5 + $0xc0] sm:$0xff]
        %v454 = vld [vmem:[#allocation5 + $0xc8] sm:$0xff]
        %v455 = vld [vmem:[#allocation5 + $0xd0] sm:$0xff]
        %v456 = vld [vmem:[#allocation5 + $0xd8] sm:$0xff]
        %v457 = vld [vmem:[#allocation5 + $0xe0] sm:$0xff]
        %v458 = vld [vmem:[#allocation5 + $0xe8] sm:$0xff]
        %v459 = vld [vmem:[#allocation5 + $0xf0] sm:$0xff]
        %v460 = vld [vmem:[#allocation5 + $0xf8] sm:$0xff]
        %v461 = vld [vmem:[#allocation7] sm:$0x3]
        %v463 = vperm.slane %v461, 0
        %v464 = vperm.slane %v461, 1
        %v499 = vunpack.c.l.b16 %v429
        %v500 = vunpack.c.h.b16 %v429
        %v501 = vunpack.c.l.b16 %v430
        %v502 = vunpack.c.h.b16 %v430
        %v503 = vunpack.c.l.b16 %v431
        %v504 = vunpack.c.h.b16 %v431
        %v505 = vunpack.c.l.b16 %v432
        %v506 = vunpack.c.h.b16 %v432
        %v507 = vunpack.c.l.b16 %v433
        %v508 = vunpack.c.h.b16 %v433
        %v509 = vunpack.c.l.b16 %v434
        %v510 = vunpack.c.h.b16 %v434
        %v511 = vunpack.c.l.b16 %v435
        %v512 = vunpack.c.h.b16 %v435
        %v513 = vunpack.c.l.b16 %v436
        %v514 = vunpack.c.h.b16 %v436
        %v515 = vunpack.c.l.b16 %v437
        %v516 = vunpack.c.h.b16 %v437
        %v517 = vunpack.c.l.b16 %v438
        %v518 = vunpack.c.h.b16 %v438
        %v519 = vunpack.c.l.b16 %v439
        %v520 = vunpack.c.h.b16 %v439
        %v521 = vunpack.c.l.b16 %v440
        %v522 = vunpack.c.h.b16 %v440
        %v523 = vunpack.c.l.b16 %v441
        %v524 = vunpack.c.h.b16 %v441
        %v525 = vunpack.c.l.b16 %v442
        %v526 = vunpack.c.h.b16 %v442
        %v527 = vunpack.c.l.b16 %v443
        %v528 = vunpack.c.h.b16 %v443
        %v529 = vunpack.c.l.b16 %v444
        %v530 = vunpack.c.h.b16 %v444
        %v531 = vunpack.c.l.b16 %v445
        %v532 = vunpack.c.h.b16 %v445
        %v533 = vunpack.c.l.b16 %v446
        %v534 = vunpack.c.h.b16 %v446
        %v535 = vunpack.c.l.b16 %v447
        %v536 = vunpack.c.h.b16 %v447
        %v537 = vunpack.c.l.b16 %v448
        %v538 = vunpack.c.h.b16 %v448
        %v539 = vunpack.c.l.b16 %v449
        %v540 = vunpack.c.h.b16 %v449
        %v541 = vunpack.c.l.b16 %v450
        %v542 = vunpack.c.h.b16 %v450
        %v543 = vunpack.c.l.b16 %v451
        %v544 = vunpack.c.h.b16 %v451
        %v545 = vunpack.c.l.b16 %v452
        %v546 = vunpack.c.h.b16 %v452
        %v547 = vunpack.c.l.b16 %v453
        %v548 = vunpack.c.h.b16 %v453
        %v549 = vunpack.c.l.b16 %v454
        %v550 = vunpack.c.h.b16 %v454
        %v551 = vunpack.c.l.b16 %v455
        %v552 = vunpack.c.h.b16 %v455
        %v553 = vunpack.c.l.b16 %v456
        %v554 = vunpack.c.h.b16 %v456
        %v555 = vunpack.c.l.b16 %v457
        %v556 = vunpack.c.h.b16 %v457
        %v557 = vunpack.c.l.b16 %v458
        %v558 = vunpack.c.h.b16 %v458
        %v559 = vunpack.c.l.b16 %v459
        %v560 = vunpack.c.h.b16 %v459
        %v561 = vunpack.c.l.b16 %v460
        %v562 = vunpack.c.h.b16 %v460
        %v563 = vpack.c.b16 %v501, %v499
        %v564 = vpack.c.b16 %v502, %v500
        %v565 = vpack.c.b16 %v505, %v503
        %v566 = vpack.c.b16 %v506, %v504
        %v567 = vpack.c.b16 %v509, %v507
        %v568 = vpack.c.b16 %v510, %v508
        %v569 = vpack.c.b16 %v513, %v511
        %v570 = vpack.c.b16 %v514, %v512
        %v571 = vpack.c.b16 %v517, %v515
        %v572 = vpack.c.b16 %v518, %v516
        %v573 = vpack.c.b16 %v521, %v519
        %v574 = vpack.c.b16 %v522, %v520
        %v575 = vpack.c.b16 %v525, %v523
        %v576 = vpack.c.b16 %v526, %v524
        %v577 = vpack.c.b16 %v529, %v527
        %v578 = vpack.c.b16 %v530, %v528
        %v579 = vpack.c.b16 %v533, %v531
        %v580 = vpack.c.b16 %v534, %v532
        %v581 = vpack.c.b16 %v537, %v535
        %v582 = vpack.c.b16 %v538, %v536
        %v583 = vpack.c.b16 %v541, %v539
        %v584 = vpack.c.b16 %v542, %v540
        %v585 = vpack.c.b16 %v545, %v543
        %v586 = vpack.c.b16 %v546, %v544
        %v587 = vpack.c.b16 %v549, %v547
        %v588 = vpack.c.b16 %v550, %v548
        %v589 = vpack.c.b16 %v553, %v551
        %v590 = vpack.c.b16 %v554, %v552
        %v591 = vpack.c.b16 %v557, %v555
        %v592 = vpack.c.b16 %v558, %v556
        %v593 = vpack.c.b16 %v561, %v559
        %v594 = vpack.c.b16 %v562, %v560
        %627 = vmatpush.bf16.msra.mxu0 %v577
        %628 = vmatpush.bf16.msra.mxu0 %v575
        %629 = vmatpush.bf16.msra.mxu0 %v573
        %630 = vmatpush.bf16.msra.mxu0 %v571
        %631 = vmatpush.bf16.msra.mxu0 %v569
        %632 = vmatpush.bf16.msra.mxu0 %v567
        %633 = vmatpush.bf16.msra.mxu0 %v565
        %634 = vmatpush.bf16.msra.mxu0 %v563
        %635 = vmatmul.bf16.gmra.mxu0 %v413
        %v636 = vpop.f32.mrf.mxu0
        %v637 = vadd.f32 %v463, %v636
        %v638 = vpop.f32.mrf.mxu0
        %v639 = vadd.f32 %v463, %v638
        %640 = vmatmul.bf16.gmra.mxu0 %v415
        %v641 = vpop.f32.mrf.mxu0
        %v642 = vadd.f32 %v463, %v641
        %v643 = vpop.f32.mrf.mxu0
        %v644 = vadd.f32 %v463, %v643
        %645 = vmatmul.bf16.gmra.mxu0 %v417
        %v646 = vpop.f32.mrf.mxu0
        %v647 = vadd.f32 %v463, %v646
        %v648 = vpop.f32.mrf.mxu0
        %v649 = vadd.f32 %v463, %v648
        %650 = vmatmul.bf16.gmra.mxu0 %v419
        %v651 = vpop.f32.mrf.mxu0
        %v652 = vadd.f32 %v463, %v651
        %v653 = vpop.f32.mrf.mxu0
        %v654 = vadd.f32 %v463, %v653
        %655 = vmatmul.bf16.gmra.mxu0 %v421
        %v656 = vpop.f32.mrf.mxu0
        %v657 = vadd.f32 %v463, %v656
        %v658 = vpop.f32.mrf.mxu0
        %v659 = vadd.f32 %v463, %v658
        %660 = vmatmul.bf16.gmra.mxu0 %v423
        %v661 = vpop.f32.mrf.mxu0
        %v662 = vadd.f32 %v463, %v661
        %v663 = vpop.f32.mrf.mxu0
        %v664 = vadd.f32 %v463, %v663
        %665 = vmatmul.bf16.gmra.mxu0 %v425
        %v666 = vpop.f32.mrf.mxu0
        %v667 = vadd.f32 %v463, %v666
        %v668 = vpop.f32.mrf.mxu0
        %v669 = vadd.f32 %v463, %v668
        %670 = vmatmul.bf16.gmra.mxu0 %v427
        %v671 = vpop.f32.mrf.mxu0
        %v672 = vadd.f32 %v463, %v671
        %v673 = vpop.f32.mrf.mxu0
        %v674 = vadd.f32 %v463, %v673
        %675 = vdwg.mxu0
        %676 = vmatpush.bf16.msra.mxu0 %v593
        %677 = vmatpush.bf16.msra.mxu0 %v591
        %678 = vmatpush.bf16.msra.mxu0 %v589
        %679 = vmatpush.bf16.msra.mxu0 %v587
        %680 = vmatpush.bf16.msra.mxu0 %v585
        %681 = vmatpush.bf16.msra.mxu0 %v583
        %682 = vmatpush.bf16.msra.mxu0 %v581
        %683 = vmatpush.bf16.msra.mxu0 %v579
        %684 = vmatmul.bf16.gmra.mxu0 %v414
        %v685 = vpop.f32.mrf.mxu0
        %v686 = vadd.f32 %v637, %v685
        %v687 = vpop.f32.mrf.mxu0
        %v688 = vadd.f32 %v639, %v687
        %689 = vmatmul.bf16.gmra.mxu0 %v416
        %v690 = vpop.f32.mrf.mxu0
        %v691 = vadd.f32 %v642, %v690
        %v692 = vpop.f32.mrf.mxu0
        %v693 = vadd.f32 %v644, %v692
        %694 = vmatmul.bf16.gmra.mxu0 %v418
        %v695 = vpop.f32.mrf.mxu0
        %v696 = vadd.f32 %v647, %v695
        %v697 = vpop.f32.mrf.mxu0
        %v698 = vadd.f32 %v649, %v697
        %699 = vmatmul.bf16.gmra.mxu0 %v420
        %v700 = vpop.f32.mrf.mxu0
        %v701 = vadd.f32 %v652, %v700
        %v702 = vpop.f32.mrf.mxu0
        %v703 = vadd.f32 %v654, %v702
        %704 = vmatmul.bf16.gmra.mxu0 %v422
        %v705 = vpop.f32.mrf.mxu0
        %v706 = vadd.f32 %v657, %v705
        %v707 = vpop.f32.mrf.mxu0
        %v708 = vadd.f32 %v659, %v707
        %709 = vmatmul.bf16.gmra.mxu0 %v424
        %v710 = vpop.f32.mrf.mxu0
        %v711 = vadd.f32 %v662, %v710
        %v712 = vpop.f32.mrf.mxu0
        %v713 = vadd.f32 %v664, %v712
        %714 = vmatmul.bf16.gmra.mxu0 %v426
        %v715 = vpop.f32.mrf.mxu0
        %v716 = vadd.f32 %v667, %v715
        %v717 = vpop.f32.mrf.mxu0
        %v718 = vadd.f32 %v669, %v717
        %719 = vmatmul.bf16.gmra.mxu0 %v428
        %v720 = vpop.f32.mrf.mxu0
        %v721 = vadd.f32 %v672, %v720
        %v722 = vpop.f32.mrf.mxu0
        %v723 = vadd.f32 %v674, %v722
        %724 = vdwg.mxu0
        %725 = vmatpush.bf16.msra.mxu0 %v578
        %726 = vmatpush.bf16.msra.mxu0 %v576
        %727 = vmatpush.bf16.msra.mxu0 %v574
        %728 = vmatpush.bf16.msra.mxu0 %v572
        %729 = vmatpush.bf16.msra.mxu0 %v570
        %730 = vmatpush.bf16.msra.mxu0 %v568
        %731 = vmatpush.bf16.msra.mxu0 %v566
        %732 = vmatpush.bf16.msra.mxu0 %v564
        %733 = vmatmul.bf16.gmra.mxu0 %v413
        %v734 = vpop.f32.mrf.mxu0
        %v735 = vadd.f32 %v464, %v734
        %v736 = vpop.f32.mrf.mxu0
        %v737 = vadd.f32 %v464, %v736
        %738 = vmatmul.bf16.gmra.mxu0 %v415
        %v739 = vpop.f32.mrf.mxu0
        %v740 = vadd.f32 %v464, %v739
        %v741 = vpop.f32.mrf.mxu0
        %v742 = vadd.f32 %v464, %v741
        %743 = vmatmul.bf16.gmra.mxu0 %v417
        %v744 = vpop.f32.mrf.mxu0
        %v745 = vadd.f32 %v464, %v744
        %v746 = vpop.f32.mrf.mxu0
        %v747 = vadd.f32 %v464, %v746
        %748 = vmatmul.bf16.gmra.mxu0 %v419
        %v749 = vpop.f32.mrf.mxu0
        %v750 = vadd.f32 %v464, %v749
        %v751 = vpop.f32.mrf.mxu0
        %v752 = vadd.f32 %v464, %v751
        %753 = vmatmul.bf16.gmra.mxu0 %v421
        %v754 = vpop.f32.mrf.mxu0
        %v755 = vadd.f32 %v464, %v754
        %v756 = vpop.f32.mrf.mxu0
        %v757 = vadd.f32 %v464, %v756
        %758 = vmatmul.bf16.gmra.mxu0 %v423
        %v759 = vpop.f32.mrf.mxu0
        %v760 = vadd.f32 %v464, %v759
        %v761 = vpop.f32.mrf.mxu0
        %v762 = vadd.f32 %v464, %v761
        %763 = vmatmul.bf16.gmra.mxu0 %v425
        %v764 = vpop.f32.mrf.mxu0
        %v765 = vadd.f32 %v464, %v764
        %v766 = vpop.f32.mrf.mxu0
        %v767 = vadd.f32 %v464, %v766
        %768 = vmatmul.bf16.gmra.mxu0 %v427
        %v769 = vpop.f32.mrf.mxu0
        %v770 = vadd.f32 %v464, %v769
        %v771 = vpop.f32.mrf.mxu0
        %v772 = vadd.f32 %v464, %v771
        %773 = vdwg.mxu0
        %774 = vmatpush.bf16.msra.mxu0 %v594
        %775 = vmatpush.bf16.msra.mxu0 %v592
        %776 = vmatpush.bf16.msra.mxu0 %v590
        %777 = vmatpush.bf16.msra.mxu0 %v588
        %778 = vmatpush.bf16.msra.mxu0 %v586
        %779 = vmatpush.bf16.msra.mxu0 %v584
        %780 = vmatpush.bf16.msra.mxu0 %v582
        %781 = vmatpush.bf16.msra.mxu0 %v580
        %782 = vmatmul.bf16.gmra.mxu0 %v414
        %v783 = vpop.f32.mrf.mxu0
        %v784 = vadd.f32 %v735, %v783
        %v785 = vpop.f32.mrf.mxu0
        %v786 = vadd.f32 %v737, %v785
        %787 = vmatmul.bf16.gmra.mxu0 %v416
        %v788 = vpop.f32.mrf.mxu0
        %v789 = vadd.f32 %v740, %v788
        %v790 = vpop.f32.mrf.mxu0
        %v791 = vadd.f32 %v742, %v790
        %792 = vmatmul.bf16.gmra.mxu0 %v418
        %v793 = vpop.f32.mrf.mxu0
        %v794 = vadd.f32 %v745, %v793
        %v795 = vpop.f32.mrf.mxu0
        %v796 = vadd.f32 %v747, %v795
        %797 = vmatmul.bf16.gmra.mxu0 %v420
        %v798 = vpop.f32.mrf.mxu0
        %v799 = vadd.f32 %v750, %v798
        %v800 = vpop.f32.mrf.mxu0
        %v801 = vadd.f32 %v752, %v800
        %802 = vmatmul.bf16.gmra.mxu0 %v422
        %v803 = vpop.f32.mrf.mxu0
        %v804 = vadd.f32 %v755, %v803
        %v805 = vpop.f32.mrf.mxu0
        %v806 = vadd.f32 %v757, %v805
        %807 = vmatmul.bf16.gmra.mxu0 %v424
        %v808 = vpop.f32.mrf.mxu0
        %v809 = vadd.f32 %v760, %v808
        %v810 = vpop.f32.mrf.mxu0
        %v811 = vadd.f32 %v762, %v810
        %812 = vmatmul.bf16.gmra.mxu0 %v426
        %v813 = vpop.f32.mrf.mxu0
        %v814 = vadd.f32 %v765, %v813
        %v815 = vpop.f32.mrf.mxu0
        %v816 = vadd.f32 %v767, %v815
        %817 = vmatmul.bf16.gmra.mxu0 %v428
        %v818 = vpop.f32.mrf.mxu0
        %v819 = vadd.f32 %v770, %v818
        %v820 = vpop.f32.mrf.mxu0
        %v821 = vadd.f32 %v772, %v820
        %822 = vdwg.mxu0
        %v823 = vmax.f32 %v686, 0.0
        %v824 = vmax.f32 %v784, 0.0
        %v825 = vmax.f32 %v688, 0.0
        %v826 = vmax.f32 %v786, 0.0
        %v827 = vmax.f32 %v691, 0.0
        %v828 = vmax.f32 %v789, 0.0
        %v829 = vmax.f32 %v693, 0.0
        %v830 = vmax.f32 %v791, 0.0
        %v831 = vmax.f32 %v696, 0.0
        %v832 = vmax.f32 %v794, 0.0
        %v833 = vmax.f32 %v698, 0.0
        %v834 = vmax.f32 %v796, 0.0
        %v835 = vmax.f32 %v701, 0.0
        %v836 = vmax.f32 %v799, 0.0
        %v837 = vmax.f32 %v703, 0.0
        %v838 = vmax.f32 %v801, 0.0
        %v839 = vmax.f32 %v706, 0.0
        %v840 = vmax.f32 %v804, 0.0
        %v841 = vmax.f32 %v708, 0.0
        %v842 = vmax.f32 %v806, 0.0
        %v843 = vmax.f32 %v711, 0.0
        %v844 = vmax.f32 %v809, 0.0
        %v845 = vmax.f32 %v713, 0.0
        %v846 = vmax.f32 %v811, 0.0
        %v847 = vmax.f32 %v716, 0.0
        %v848 = vmax.f32 %v814, 0.0
        %v849 = vmax.f32 %v718, 0.0
        %v850 = vmax.f32 %v816, 0.0
        %v851 = vmax.f32 %v721, 0.0
        %v852 = vmax.f32 %v819, 0.0
        %v853 = vmax.f32 %v723, 0.0
        %v854 = vmax.f32 %v821, 0.0
        %v855 = vpack.c.bf16 %v825, %v823
        %v856 = vpack.c.bf16 %v826, %v824
        %v857 = vpack.c.bf16 %v829, %v827
        %v858 = vpack.c.bf16 %v830, %v828
        %v859 = vpack.c.bf16 %v833, %v831
        %v860 = vpack.c.bf16 %v834, %v832
        %v861 = vpack.c.bf16 %v837, %v835
        %v862 = vpack.c.bf16 %v838, %v836
        %v863 = vpack.c.bf16 %v841, %v839
        %v864 = vpack.c.bf16 %v842, %v840
        %v865 = vpack.c.bf16 %v845, %v843
        %v866 = vpack.c.bf16 %v846, %v844
        %v867 = vpack.c.bf16 %v849, %v847
        %v868 = vpack.c.bf16 %v850, %v848
        %v869 = vpack.c.bf16 %v853, %v851
        %v870 = vpack.c.bf16 %v854, %v852
        %v871 = vld [vmem:[#allocation8] sm:$0xf]
        %v872 = vld [vmem:[#allocation8 + $0x4] sm:$0xf]
        %v873 = vld [vmem:[#allocation8 + $0x8] sm:$0xf]
        %v874 = vld [vmem:[#allocation8 + $0xc] sm:$0xf]
        %v875 = vld [vmem:[#allocation8 + $0x10] sm:$0xf]
        %v876 = vld [vmem:[#allocation8 + $0x14] sm:$0xf]
        %v877 = vld [vmem:[#allocation8 + $0x18] sm:$0xf]
        %v878 = vld [vmem:[#allocation8 + $0x1c] sm:$0xf]
        %v879 = vld [vmem:[#allocation8 + $0x20] sm:$0xf]
        %v880 = vld [vmem:[#allocation8 + $0x24] sm:$0xf]
        %v881 = vld [vmem:[#allocation8 + $0x28] sm:$0xf]
        %v882 = vld [vmem:[#allocation8 + $0x2c] sm:$0xf]
        %v883 = vld [vmem:[#allocation8 + $0x30] sm:$0xf]
        %v884 = vld [vmem:[#allocation8 + $0x34] sm:$0xf]
        %v885 = vld [vmem:[#allocation8 + $0x38] sm:$0xf]
        %v886 = vld [vmem:[#allocation8 + $0x3c] sm:$0xf]
        %v887 = vld [vmem:[#allocation8 + $0x40] sm:$0xf]
        %v888 = vld [vmem:[#allocation8 + $0x44] sm:$0xf]
        %v889 = vld [vmem:[#allocation8 + $0x48] sm:$0xf]
        %v890 = vld [vmem:[#allocation8 + $0x4c] sm:$0xf]
        %v891 = vld [vmem:[#allocation8 + $0x50] sm:$0xf]
        %v892 = vld [vmem:[#allocation8 + $0x54] sm:$0xf]
        %v893 = vld [vmem:[#allocation8 + $0x58] sm:$0xf]
        %v894 = vld [vmem:[#allocation8 + $0x5c] sm:$0xf]
        %v895 = vld [vmem:[#allocation8 + $0x60] sm:$0xf]
        %v896 = vld [vmem:[#allocation8 + $0x64] sm:$0xf]
        %v897 = vld [vmem:[#allocation8 + $0x68] sm:$0xf]
        %v898 = vld [vmem:[#allocation8 + $0x6c] sm:$0xf]
        %v899 = vld [vmem:[#allocation8 + $0x70] sm:$0xf]
        %v900 = vld [vmem:[#allocation8 + $0x74] sm:$0xf]
        %v901 = vld [vmem:[#allocation8 + $0x78] sm:$0xf]
        %v902 = vld [vmem:[#allocation8 + $0x7c] sm:$0xf]
        %v903 = vld [vmem:[#allocation10] sm:$0x1]
        %v905 = vperm.slane %v903, 0
        %v939 = vunpack.c.l.b16 %v871
        %v940 = vunpack.c.l.b16 %v872
        %v941 = vunpack.c.l.b16 %v873
        %v942 = vunpack.c.l.b16 %v874
        %v943 = vunpack.c.l.b16 %v875
        %v944 = vunpack.c.l.b16 %v876
        %v945 = vunpack.c.l.b16 %v877
        %v946 = vunpack.c.l.b16 %v878
        %v947 = vunpack.c.l.b16 %v879
        %v948 = vunpack.c.l.b16 %v880
        %v949 = vunpack.c.l.b16 %v881
        %v950 = vunpack.c.l.b16 %v882
        %v951 = vunpack.c.l.b16 %v883
        %v952 = vunpack.c.l.b16 %v884
        %v953 = vunpack.c.l.b16 %v885
        %v954 = vunpack.c.l.b16 %v886
        %v955 = vunpack.c.l.b16 %v887
        %v956 = vunpack.c.l.b16 %v888
        %v957 = vunpack.c.l.b16 %v889
        %v958 = vunpack.c.l.b16 %v890
        %v959 = vunpack.c.l.b16 %v891
        %v960 = vunpack.c.l.b16 %v892
        %v961 = vunpack.c.l.b16 %v893
        %v962 = vunpack.c.l.b16 %v894
        %v963 = vunpack.c.l.b16 %v895
        %v964 = vunpack.c.l.b16 %v896
        %v965 = vunpack.c.l.b16 %v897
        %v966 = vunpack.c.l.b16 %v898
        %v967 = vunpack.c.l.b16 %v899
        %v968 = vunpack.c.l.b16 %v900
        %v969 = vunpack.c.l.b16 %v901
        %v970 = vunpack.c.l.b16 %v902
        %v971 = vpack.c.b16 %v940, %v939
        %v972 = vpack.c.b16 %v942, %v941
        %v973 = vpack.c.b16 %v944, %v943
        %v974 = vpack.c.b16 %v946, %v945
        %v975 = vpack.c.b16 %v948, %v947
        %v976 = vpack.c.b16 %v950, %v949
        %v977 = vpack.c.b16 %v952, %v951
        %v978 = vpack.c.b16 %v954, %v953
        %v979 = vpack.c.b16 %v956, %v955
        %v980 = vpack.c.b16 %v958, %v957
        %v981 = vpack.c.b16 %v960, %v959
        %v982 = vpack.c.b16 %v962, %v961
        %v983 = vpack.c.b16 %v964, %v963
        %v984 = vpack.c.b16 %v966, %v965
        %v985 = vpack.c.b16 %v968, %v967
        %v986 = vpack.c.b16 %v970, %v969
        %1003 = vmatpush.bf16.msra.mxu0 %v978
        %1004 = vmatpush.bf16.msra.mxu0 %v977
        %1005 = vmatpush.bf16.msra.mxu0 %v976
        %1006 = vmatpush.bf16.msra.mxu0 %v975
        %1007 = vmatpush.bf16.msra.mxu0 %v974
        %1008 = vmatpush.bf16.msra.mxu0 %v973
        %1009 = vmatpush.bf16.msra.mxu0 %v972
        %1010 = vmatpush.bf16.msra.mxu0 %v971
        %1011 = vmatmul.bf16.gmra.mxu0 %v855
        %v1012 = vpop.f32.mrf.mxu0
        %v1013 = vadd.f32 %v905, %v1012
        %v1014 = vpop.f32.mrf.mxu0
        %v1015 = vadd.f32 %v905, %v1014
        %1016 = vmatmul.bf16.gmra.mxu0 %v857
        %v1017 = vpop.f32.mrf.mxu0
        %v1018 = vadd.f32 %v905, %v1017
        %v1019 = vpop.f32.mrf.mxu0
        %v1020 = vadd.f32 %v905, %v1019
        %1021 = vmatmul.bf16.gmra.mxu0 %v859
        %v1022 = vpop.f32.mrf.mxu0
        %v1023 = vadd.f32 %v905, %v1022
        %v1024 = vpop.f32.mrf.mxu0
        %v1025 = vadd.f32 %v905, %v1024
        %1026 = vmatmul.bf16.gmra.mxu0 %v861
        %v1027 = vpop.f32.mrf.mxu0
        %v1028 = vadd.f32 %v905, %v1027
        %v1029 = vpop.f32.mrf.mxu0
        %v1030 = vadd.f32 %v905, %v1029
        %1031 = vmatmul.bf16.gmra.mxu0 %v863
        %v1032 = vpop.f32.mrf.mxu0
        %v1033 = vadd.f32 %v905, %v1032
        %v1034 = vpop.f32.mrf.mxu0
        %v1035 = vadd.f32 %v905, %v1034
        %1036 = vmatmul.bf16.gmra.mxu0 %v865
        %v1037 = vpop.f32.mrf.mxu0
        %v1038 = vadd.f32 %v905, %v1037
        %v1039 = vpop.f32.mrf.mxu0
        %v1040 = vadd.f32 %v905, %v1039
        %1041 = vmatmul.bf16.gmra.mxu0 %v867
        %v1042 = vpop.f32.mrf.mxu0
        %v1043 = vadd.f32 %v905, %v1042
        %v1044 = vpop.f32.mrf.mxu0
        %v1045 = vadd.f32 %v905, %v1044
        %1046 = vmatmul.bf16.gmra.mxu0 %v869
        %v1047 = vpop.f32.mrf.mxu0
        %v1048 = vadd.f32 %v905, %v1047
        %v1049 = vpop.f32.mrf.mxu0
        %v1050 = vadd.f32 %v905, %v1049
        %1051 = vdwg.mxu0
        %1052 = vmatpush.bf16.msra.mxu0 %v986
        %1053 = vmatpush.bf16.msra.mxu0 %v985
        %1054 = vmatpush.bf16.msra.mxu0 %v984
        %1055 = vmatpush.bf16.msra.mxu0 %v983
        %1056 = vmatpush.bf16.msra.mxu0 %v982
        %1057 = vmatpush.bf16.msra.mxu0 %v981
        %1058 = vmatpush.bf16.msra.mxu0 %v980
        %1059 = vmatpush.bf16.msra.mxu0 %v979
        %1060 = vmatmul.bf16.gmra.mxu0 %v856
        %v1061 = vpop.f32.mrf.mxu0
        %v1062 = vadd.f32 %v1013, %v1061
        %v1063 = vpop.f32.mrf.mxu0
        %v1064 = vadd.f32 %v1015, %v1063
        %1065 = vmatmul.bf16.gmra.mxu0 %v858
        %v1066 = vpop.f32.mrf.mxu0
        %v1067 = vadd.f32 %v1018, %v1066
        %v1068 = vpop.f32.mrf.mxu0
        %v1069 = vadd.f32 %v1020, %v1068
        %1070 = vmatmul.bf16.gmra.mxu0 %v860
        %v1071 = vpop.f32.mrf.mxu0
        %v1072 = vadd.f32 %v1023, %v1071
        %v1073 = vpop.f32.mrf.mxu0
        %v1074 = vadd.f32 %v1025, %v1073
        %1075 = vmatmul.bf16.gmra.mxu0 %v862
        %v1076 = vpop.f32.mrf.mxu0
        %v1077 = vadd.f32 %v1028, %v1076
        %v1078 = vpop.f32.mrf.mxu0
        %v1079 = vadd.f32 %v1030, %v1078
        %1080 = vmatmul.bf16.gmra.mxu0 %v864
        %v1081 = vpop.f32.mrf.mxu0
        %v1082 = vadd.f32 %v1033, %v1081
        %v1083 = vpop.f32.mrf.mxu0
        %v1084 = vadd.f32 %v1035, %v1083
        %1085 = vmatmul.bf16.gmra.mxu0 %v866
        %v1086 = vpop.f32.mrf.mxu0
        %v1087 = vadd.f32 %v1038, %v1086
        %v1088 = vpop.f32.mrf.mxu0
        %v1089 = vadd.f32 %v1040, %v1088
        %1090 = vmatmul.bf16.gmra.mxu0 %v868
        %v1091 = vpop.f32.mrf.mxu0
        %v1092 = vadd.f32 %v1043, %v1091
        %v1093 = vpop.f32.mrf.mxu0
        %v1094 = vadd.f32 %v1045, %v1093
        %1095 = vmatmul.bf16.gmra.mxu0 %v870
        %v1096 = vpop.f32.mrf.mxu0
        %v1097 = vadd.f32 %v1048, %v1096
        %v1098 = vpop.f32.mrf.mxu0
        %v1099 = vadd.f32 %v1050, %v1098
        %1100 = vdwg.mxu0
        %v1101 = vmax.f32 %v1062, 0.0
        %v1102 = vmax.f32 %v1064, 0.0
        %v1103 = vmax.f32 %v1067, 0.0
        %v1104 = vmax.f32 %v1069, 0.0
        %v1105 = vmax.f32 %v1072, 0.0
        %v1106 = vmax.f32 %v1074, 0.0
        %v1107 = vmax.f32 %v1077, 0.0
        %v1108 = vmax.f32 %v1079, 0.0
        %v1109 = vmax.f32 %v1082, 0.0
        %v1110 = vmax.f32 %v1084, 0.0
        %v1111 = vmax.f32 %v1087, 0.0
        %v1112 = vmax.f32 %v1089, 0.0
        %v1113 = vmax.f32 %v1092, 0.0
        %v1114 = vmax.f32 %v1094, 0.0
        %v1115 = vmax.f32 %v1097, 0.0
        %v1116 = vmax.f32 %v1099, 0.0
        %v1117 = vpack.c.bf16 %v1102, %v1101
        %v1118 = vpack.c.bf16 %v1104, %v1103
        %v1119 = vpack.c.bf16 %v1106, %v1105
        %v1120 = vpack.c.bf16 %v1108, %v1107
        %v1121 = vpack.c.bf16 %v1110, %v1109
        %v1122 = vpack.c.bf16 %v1112, %v1111
        %v1123 = vpack.c.bf16 %v1114, %v1113
        %v1124 = vpack.c.bf16 %v1116, %v1115
        %v1125 = vld [vmem:[#allocation11] sm:$0xff]
        %v1126 = vld [vmem:[#allocation11 + $0x8] sm:$0xff]
        %v1127 = vld [vmem:[#allocation11 + $0x10] sm:$0xff]
        %v1128 = vld [vmem:[#allocation11 + $0x18] sm:$0xff]
        %v1129 = vld [vmem:[#allocation11 + $0x20] sm:$0xff]
        %v1130 = vld [vmem:[#allocation11 + $0x28] sm:$0xff]
        %v1131 = vld [vmem:[#allocation11 + $0x30] sm:$0xff]
        %v1132 = vld [vmem:[#allocation11 + $0x38] sm:$0xff]
        %v1133 = vld [vmem:[#allocation11 + $0x40] sm:$0xff]
        %v1134 = vld [vmem:[#allocation11 + $0x48] sm:$0xff]
        %v1135 = vld [vmem:[#allocation11 + $0x50] sm:$0xff]
        %v1136 = vld [vmem:[#allocation11 + $0x58] sm:$0xff]
        %v1137 = vld [vmem:[#allocation11 + $0x60] sm:$0xff]
        %v1138 = vld [vmem:[#allocation11 + $0x68] sm:$0xff]
        %v1139 = vld [vmem:[#allocation11 + $0x70] sm:$0xff]
        %v1140 = vld [vmem:[#allocation11 + $0x78] sm:$0xff]
        %v1141 = vld [vmem:[%s6] sm:$0x3]
        %v1143 = vperm.slane %v1141, 0
        %v1144 = vperm.slane %v1141, 1
        %v1163 = vunpack.c.l.b16 %v1125
        %v1164 = vunpack.c.h.b16 %v1125
        %v1165 = vunpack.c.l.b16 %v1126
        %v1166 = vunpack.c.h.b16 %v1126
        %v1167 = vunpack.c.l.b16 %v1127
        %v1168 = vunpack.c.h.b16 %v1127
        %v1169 = vunpack.c.l.b16 %v1128
        %v1170 = vunpack.c.h.b16 %v1128
        %v1171 = vunpack.c.l.b16 %v1129
        %v1172 = vunpack.c.h.b16 %v1129
        %v1173 = vunpack.c.l.b16 %v1130
        %v1174 = vunpack.c.h.b16 %v1130
        %v1175 = vunpack.c.l.b16 %v1131
        %v1176 = vunpack.c.h.b16 %v1131
        %v1177 = vunpack.c.l.b16 %v1132
        %v1178 = vunpack.c.h.b16 %v1132
        %v1179 = vunpack.c.l.b16 %v1133
        %v1180 = vunpack.c.h.b16 %v1133
        %v1181 = vunpack.c.l.b16 %v1134
        %v1182 = vunpack.c.h.b16 %v1134
        %v1183 = vunpack.c.l.b16 %v1135
        %v1184 = vunpack.c.h.b16 %v1135
        %v1185 = vunpack.c.l.b16 %v1136
        %v1186 = vunpack.c.h.b16 %v1136
        %v1187 = vunpack.c.l.b16 %v1137
        %v1188 = vunpack.c.h.b16 %v1137
        %v1189 = vunpack.c.l.b16 %v1138
        %v1190 = vunpack.c.h.b16 %v1138
        %v1191 = vunpack.c.l.b16 %v1139
        %v1192 = vunpack.c.h.b16 %v1139
        %v1193 = vunpack.c.l.b16 %v1140
        %v1194 = vunpack.c.h.b16 %v1140
        %v1195 = vpack.c.b16 %v1165, %v1163
        %v1196 = vpack.c.b16 %v1166, %v1164
        %v1197 = vpack.c.b16 %v1169, %v1167
        %v1198 = vpack.c.b16 %v1170, %v1168
        %v1199 = vpack.c.b16 %v1173, %v1171
        %v1200 = vpack.c.b16 %v1174, %v1172
        %v1201 = vpack.c.b16 %v1177, %v1175
        %v1202 = vpack.c.b16 %v1178, %v1176
        %v1203 = vpack.c.b16 %v1181, %v1179
        %v1204 = vpack.c.b16 %v1182, %v1180
        %v1205 = vpack.c.b16 %v1185, %v1183
        %v1206 = vpack.c.b16 %v1186, %v1184
        %v1207 = vpack.c.b16 %v1189, %v1187
        %v1208 = vpack.c.b16 %v1190, %v1188
        %v1209 = vpack.c.b16 %v1193, %v1191
        %v1210 = vpack.c.b16 %v1194, %v1192
        %1227 = vmatpush.bf16.msra.mxu0 %v1209
        %1228 = vmatpush.bf16.msra.mxu0 %v1207
        %1229 = vmatpush.bf16.msra.mxu0 %v1205
        %1230 = vmatpush.bf16.msra.mxu0 %v1203
        %1231 = vmatpush.bf16.msra.mxu0 %v1201
        %1232 = vmatpush.bf16.msra.mxu0 %v1199
        %1233 = vmatpush.bf16.msra.mxu0 %v1197
        %1234 = vmatpush.bf16.msra.mxu0 %v1195
        %1235 = vmatmul.bf16.gmra.mxu0 %v1117
        %v1236 = vpop.f32.mrf.mxu0
        %v1237 = vadd.f32 %v1143, %v1236
        %v1238 = vpop.f32.mrf.mxu0
        %v1239 = vadd.f32 %v1143, %v1238
        %1240 = vmatmul.bf16.gmra.mxu0 %v1118
        %v1241 = vpop.f32.mrf.mxu0
        %v1242 = vadd.f32 %v1143, %v1241
        %v1243 = vpop.f32.mrf.mxu0
        %v1244 = vadd.f32 %v1143, %v1243
        %1245 = vmatmul.bf16.gmra.mxu0 %v1119
        %v1246 = vpop.f32.mrf.mxu0
        %v1247 = vadd.f32 %v1143, %v1246
        %v1248 = vpop.f32.mrf.mxu0
        %v1249 = vadd.f32 %v1143, %v1248
        %1250 = vmatmul.bf16.gmra.mxu0 %v1120
        %v1251 = vpop.f32.mrf.mxu0
        %v1252 = vadd.f32 %v1143, %v1251
        %v1253 = vpop.f32.mrf.mxu0
        %v1254 = vadd.f32 %v1143, %v1253
        %1255 = vmatmul.bf16.gmra.mxu0 %v1121
        %v1256 = vpop.f32.mrf.mxu0
        %v1257 = vadd.f32 %v1143, %v1256
        %v1258 = vpop.f32.mrf.mxu0
        %v1259 = vadd.f32 %v1143, %v1258
        %1260 = vmatmul.bf16.gmra.mxu0 %v1122
        %v1261 = vpop.f32.mrf.mxu0
        %v1262 = vadd.f32 %v1143, %v1261
        %v1263 = vpop.f32.mrf.mxu0
        %v1264 = vadd.f32 %v1143, %v1263
        %1265 = vmatmul.bf16.gmra.mxu0 %v1123
        %v1266 = vpop.f32.mrf.mxu0
        %v1267 = vadd.f32 %v1143, %v1266
        %v1268 = vpop.f32.mrf.mxu0
        %v1269 = vadd.f32 %v1143, %v1268
        %1270 = vmatmul.bf16.gmra.mxu0 %v1124
        %v1271 = vpop.f32.mrf.mxu0
        %v1272 = vadd.f32 %v1143, %v1271
        %v1273 = vpop.f32.mrf.mxu0
        %v1274 = vadd.f32 %v1143, %v1273
        %1275 = vdwg.mxu0
        %1276 = vmatpush.bf16.msra.mxu0 %v1210
        %1277 = vmatpush.bf16.msra.mxu0 %v1208
        %1278 = vmatpush.bf16.msra.mxu0 %v1206
        %1279 = vmatpush.bf16.msra.mxu0 %v1204
        %1280 = vmatpush.bf16.msra.mxu0 %v1202
        %1281 = vmatpush.bf16.msra.mxu0 %v1200
        %1282 = vmatpush.bf16.msra.mxu0 %v1198
        %1283 = vmatpush.bf16.msra.mxu0 %v1196
        %1284 = vmatmul.bf16.gmra.mxu0 %v1117
        %v1285 = vpop.f32.mrf.mxu0
        %v1286 = vadd.f32 %v1144, %v1285
        %v1287 = vpop.f32.mrf.mxu0
        %v1288 = vadd.f32 %v1144, %v1287
        %1289 = vmatmul.bf16.gmra.mxu0 %v1118
        %v1290 = vpop.f32.mrf.mxu0
        %v1291 = vadd.f32 %v1144, %v1290
        %v1292 = vpop.f32.mrf.mxu0
        %v1293 = vadd.f32 %v1144, %v1292
        %1294 = vmatmul.bf16.gmra.mxu0 %v1119
        %v1295 = vpop.f32.mrf.mxu0
        %v1296 = vadd.f32 %v1144, %v1295
        %v1297 = vpop.f32.mrf.mxu0
        %v1298 = vadd.f32 %v1144, %v1297
        %1299 = vmatmul.bf16.gmra.mxu0 %v1120
        %v1300 = vpop.f32.mrf.mxu0
        %v1301 = vadd.f32 %v1144, %v1300
        %v1302 = vpop.f32.mrf.mxu0
        %v1303 = vadd.f32 %v1144, %v1302
        %1304 = vmatmul.bf16.gmra.mxu0 %v1121
        %v1305 = vpop.f32.mrf.mxu0
        %v1306 = vadd.f32 %v1144, %v1305
        %v1307 = vpop.f32.mrf.mxu0
        %v1308 = vadd.f32 %v1144, %v1307
        %1309 = vmatmul.bf16.gmra.mxu0 %v1122
        %v1310 = vpop.f32.mrf.mxu0
        %v1311 = vadd.f32 %v1144, %v1310
        %v1312 = vpop.f32.mrf.mxu0
        %v1313 = vadd.f32 %v1144, %v1312
        %1314 = vmatmul.bf16.gmra.mxu0 %v1123
        %v1315 = vpop.f32.mrf.mxu0
        %v1316 = vadd.f32 %v1144, %v1315
        %v1317 = vpop.f32.mrf.mxu0
        %v1318 = vadd.f32 %v1144, %v1317
        %1319 = vmatmul.bf16.gmra.mxu0 %v1124
        %v1320 = vpop.f32.mrf.mxu0
        %v1321 = vadd.f32 %v1144, %v1320
        %v1322 = vpop.f32.mrf.mxu0
        %v1323 = vadd.f32 %v1144, %v1322
        %1324 = vdwg.mxu0
        %v1325 = vtanh.pop %v1237
        %v1326 = vtanh.pop %v1286
        %v1327 = vtanh.pop %v1239
        %v1328 = vtanh.pop %v1288
        %v1329 = vtanh.pop %v1242
        %v1330 = vtanh.pop %v1291
        %v1331 = vtanh.pop %v1244
        %v1332 = vtanh.pop %v1293
        %v1333 = vtanh.pop %v1247
        %v1334 = vtanh.pop %v1296
        %v1335 = vtanh.pop %v1249
        %v1336 = vtanh.pop %v1298
        %v1337 = vtanh.pop %v1252
        %v1338 = vtanh.pop %v1301
        %v1339 = vtanh.pop %v1254
        %v1340 = vtanh.pop %v1303
        %v1341 = vtanh.pop %v1257
        %v1342 = vtanh.pop %v1306
        %v1343 = vtanh.pop %v1259
        %v1344 = vtanh.pop %v1308
        %v1345 = vtanh.pop %v1262
        %v1346 = vtanh.pop %v1311
        %v1347 = vtanh.pop %v1264
        %v1348 = vtanh.pop %v1313
        %v1349 = vtanh.pop %v1267
        %v1350 = vtanh.pop %v1316
        %v1351 = vtanh.pop %v1269
        %v1352 = vtanh.pop %v1318
        %v1353 = vtanh.pop %v1272
        %v1354 = vtanh.pop %v1321
        %v1355 = vtanh.pop %v1274
        %v1356 = vtanh.pop %v1323
        %1357 = vst [vmem:[%s378] sm:$0xff] %v1325
        %1358 = vst [vmem:[%s378 + $0x8] sm:$0xff] %v1326
        %1359 = vst [vmem:[%s378 + $0x10] sm:$0xff] %v1327
        %1360 = vst [vmem:[%s378 + $0x18] sm:$0xff] %v1328
        %1361 = vst [vmem:[%s378 + $0x20] sm:$0xff] %v1329
        %1362 = vst [vmem:[%s378 + $0x28] sm:$0xff] %v1330
        %1363 = vst [vmem:[%s378 + $0x30] sm:$0xff] %v1331
        %1364 = vst [vmem:[%s378 + $0x38] sm:$0xff] %v1332
        %1365 = vst [vmem:[%s378 + $0x40] sm:$0xff] %v1333
        %1366 = vst [vmem:[%s378 + $0x48] sm:$0xff] %v1334
        %1367 = vst [vmem:[%s378 + $0x50] sm:$0xff] %v1335
        %1368 = vst [vmem:[%s378 + $0x58] sm:$0xff] %v1336
        %1369 = vst [vmem:[%s378 + $0x60] sm:$0xff] %v1337
        %1370 = vst [vmem:[%s378 + $0x68] sm:$0xff] %v1338
        %1371 = vst [vmem:[%s378 + $0x70] sm:$0xff] %v1339
        %1372 = vst [vmem:[%s378 + $0x78] sm:$0xff] %v1340
        %1373 = vst [vmem:[%s378 + $0x80] sm:$0xff] %v1341
        %1374 = vst [vmem:[%s378 + $0x88] sm:$0xff] %v1342
        %1375 = vst [vmem:[%s378 + $0x90] sm:$0xff] %v1343
        %1376 = vst [vmem:[%s378 + $0x98] sm:$0xff] %v1344
        %1377 = vst [vmem:[%s378 + $0xa0] sm:$0xff] %v1345
        %1378 = vst [vmem:[%s378 + $0xa8] sm:$0xff] %v1346
        %1379 = vst [vmem:[%s378 + $0xb0] sm:$0xff] %v1347
        %1380 = vst [vmem:[%s378 + $0xb8] sm:$0xff] %v1348
        %1381 = vst [vmem:[%s378 + $0xc0] sm:$0xff] %v1349
        %1382 = vst [vmem:[%s378 + $0xc8] sm:$0xff] %v1350
        %1383 = vst [vmem:[%s378 + $0xd0] sm:$0xff] %v1351
        %1384 = vst [vmem:[%s378 + $0xd8] sm:$0xff] %v1352
        %1385 = vst [vmem:[%s378 + $0xe0] sm:$0xff] %v1353
        %1386 = vst [vmem:[%s378 + $0xe8] sm:$0xff] %v1354
        %1387 = vst [vmem:[%s378 + $0xf0] sm:$0xff] %v1355
        %1388 = vst [vmem:[%s378 + $0xf8] sm:$0xff] %v1356
        %s1389 = sand.u32 %s187, 1
        %s1390 = scalar_lea.sflag [#allocation4], %s1389
        %s1391 = sand.u32 %s187, 1
        %s1392 = smul.addr %s1391, 256
        %s1393 = scalar_lea.vmem [#allocation13], %s1392
        // Predicated region
        $region73: #{fully_connected_forward.1} parent=47 // pred_check
          %p1394 = pneg %p197
        $region74: #{fully_connected_forward.1} parent=47 // pred_check_branch
          %1396 = sbr.rel (%p1394) target = $region76
        $region75: #{fully_connected_forward.1} parent=47 // pred_region
          %s1397 = smul.u32 16, %s27
          %1399 = vsyncadd %s1390, 0
          %s1400 = smul.addr %s1397, 2
          %s1401 = smul.addr %s1400, 8
          %s1402 = scalar_lea.hbm %s7, %s1401
          %s1403 = sshll.u32 %s1393, 4
          %s1404 = int_to_ptr.vmem [resolvable:$true] %s1403
          %s1405 = sshll.u32 %s1402, 4
          %s1406 = int_to_ptr.hbm [resolvable:$true] %s1405
          %1411 = dma.vmem_to_hbm [thread:$0]  %s1404, 4096, %s1406, %s1390, 256, 256, 16
        $region76: #{fully_connected_forward.1} parent=47 // pred_fallthru
          _
      $region48: #{fully_connected_forward.1} parent=5 // pred_fallthru
        _
      %p1412 = scmp.le.s32.totalorder 2, %s22
      // Predicated region
      $region77: #{fully_connected_forward.1} parent=5 // pred_check
        %p1413 = pneg %p1412
      $region78: #{fully_connected_forward.1} parent=5 // pred_check_branch
        %1415 = sbr.rel (%p1413) target = $region80
      $region79: #{fully_connected_forward.1} parent=5 // pred_region
        %s1416 = ssub.s32 %s22, 2
        // Predicated region
        $region81: #{fully_connected_forward.1} parent=79 // pred_check
          %p1417 = pneg %p203
        $region82: #{fully_connected_forward.1} parent=79 // pred_check_branch
          %1419 = sbr.rel (%p1417) target = $region84
        $region83: #{fully_connected_forward.1} parent=79 // pred_region
          %s1420 = sand.u32 %s188, 1
          %s1421 = scalar_lea.sflag [#allocation4], %s1420
          %s1422 = sand.u32 %s188, 1
          %s1423 = smul.addr %s1422, 256
          %s1424 = scalar_lea.vmem [#allocation13], %s1423
          %1426 = dma.done %s1421, 4096
        $region84: #{fully_connected_forward.1} parent=79 // pred_fallthru
          _
      $region80: #{fully_connected_forward.1} parent=5 // pred_fallthru
        _
    $region6: #{fully_connected_forward.1} parent=1 // loop_footer
      %s26 = sadd.s32 1, %s22
    $region7: #{fully_connected_forward.1} parent=1 // loop_footer_branch
      %21 = sbr.rel target = $region3
    $region8: #{fully_connected_forward.1} parent=1 // loop_exit
      _
    %1427 = vsyncpa [#allocation3], 1
    %s1428 = scalar_lea.sflag [#allocation3], 1
    %1429 = vsyncpa %s1428, 1
    %1430 = vsyncpa [#allocation6], 1
    %1431 = vsyncpa [#allocation9], 1
    %1432 = vsyncpa [#allocation12], 1
    %1433 = vsyncpa [#allocation4], 1
    %s1434 = scalar_lea.sflag [#allocation4], 1
    %1435 = vsyncpa %s1434, 1

</llo_original>
